<compile_context>
chip_gen: v5e
topology: v5e:2x2
jax: 0.10.0
libtpu: 0.0.40
codegen_flags: <defaults>
</compile_context>

<pallas_src>
import math

import jax
import jax.numpy as jnp
from jax import lax
from jax.experimental import pallas as pl
from jax.experimental.pallas import tpu as pltpu

INV_SQRT2 = 1.0 / math.sqrt(2.0)


def _gelu_exact(y):
    # matches torch.nn.functional.gelu default (erf-based)
    return 0.5 * y * (1.0 + lax.erf(y * INV_SQRT2))


# ---------------------------------------------------------------------------
# per-generation VMEM budgeting
# ---------------------------------------------------------------------------
def _vmem_capacity_bytes():
    try:
        return int(pltpu.get_tpu_info().vmem_capacity_bytes)
    except Exception:
        return 64 << 20            # conservative default (v7x per-TensorCore)


def _vmem_budget_bytes():
    cap = _vmem_capacity_bytes()
    # keep the per-step working set well under physical VMEM
    # (v7x: 64 MiB -> 32 MiB budget; v5e/v6e: 128 MiB -> 48 MiB budget)
    return min(cap // 2, 48 << 20)


def _mosaic_params(semantics, footprint_bytes):
    cap = _vmem_capacity_bytes()
    limit = max(int(footprint_bytes) + (8 << 20), 32 << 20)
    limit = min(limit, (cap * 3) // 4)
    return pltpu.CompilerParams(dimension_semantics=semantics,
                                vmem_limit_bytes=limit)


# ---------------------------------------------------------------------------
# Kernel A: complex per-mode channel mixing (SpectralConv hot path)
#   out[b, o, m] = sum_c x[b, c, m] * w[c, o, m]        (complex arithmetic)
# x is laid out (C, B, M) so the contraction slices the leading axis; the
# output-channel axis is broadcast (no replication copies).
# ---------------------------------------------------------------------------
def _spectral_footprint(B, C, M, tile_o):
    f32 = 4
    x_bytes = 2 * (C * B * M) * f32 * 2         # xr, xi (2 pipeline buffers)
    w_bytes = 2 * (C * tile_o * M) * f32 * 2    # wr, wi double-buffered
    o_bytes = 2 * (B * tile_o * M) * f32 * 2    # out_r, out_i double-buffered
    acc_bytes = 2 * (B * tile_o * M) * f32      # in-kernel accumulators
    return x_bytes + w_bytes + o_bytes + acc_bytes


def _pick_o_tile(O, M, B, C, budget):
    # tile_o must divide O and be sublane-legal (multiple of 8, or the full O)
    cands = [t for t in range(1, O + 1)
             if O % t == 0 and (t % 8 == 0 or t == O)]
    fitting = [t for t in cands if _spectral_footprint(B, C, M, t) <= budget]
    if not fitting:
        fitting = [min(cands)]
    # prefer >= 2 grid steps so the "parallel" axis can feed both v7x TensorCores
    multi = [t for t in fitting if O // t >= 2]
    pool = multi if multi else fitting
    return max(pool)


def _spectral_mix_kernel(xr_ref, xi_ref, wr_ref, wi_ref, or_ref, oi_ref):
    # xr/xi: (C, B, M)   wr/wi: (C, tile_o, M)   out: (B, tile_o, M)
    C, B, M = xr_ref.shape
    tile_o = wr_ref.shape[1]

    def step(c, carry):
        acc_r, acc_i = carry
        xr_c = xr_ref[c][:, None, :]             # (B, 1, M)
        xi_c = xi_ref[c][:, None, :]
        wr_c = wr_ref[c][None, :, :]             # (1, tile_o, M)
        wi_c = wi_ref[c][None, :, :]
        # 3-multiply (Karatsuba) complex product; w-only sums carry no B axis
        # and the x-only sum carries no tile_o axis, so they are cheap.
        xs = xr_c + xi_c                         # (B, 1, M)
        wd = wi_c - wr_c                         # (1, tile_o, M)
        ws = wr_c + wi_c
        k1 = wr_c * xs                           # (B, tile_o, M)
        k2 = xr_c * wd
        k3 = xi_c * ws
        return acc_r + (k1 - k3), acc_i + (k1 + k2)

    acc0 = (jnp.zeros((B, tile_o, M), jnp.float32),
            jnp.zeros((B, tile_o, M), jnp.float32))
    if C <= 8:
        # tiny in_channels (toy case): full static unroll is fine
        acc_r, acc_i = acc0
        for c in range(C):
            acc_r, acc_i = step(c, (acc_r, acc_i))
    else:
        # real widths: bound vreg live ranges, per-iteration ref slices
        acc_r, acc_i = lax.fori_loop(0, C, step, acc0, unroll=4)
    or_ref[...] = acc_r
    oi_ref[...] = acc_i


def spectral_mix(xr_cbm, xi_cbm, wr, wi):
    """xr/xi: (C, B, M) real/imag retained modes; wr/wi: (C, O, M).
    Returns real/imag outputs of shape (B, O, M), f32."""
    C, B, M = xr_cbm.shape
    O = wr.shape[1]
    budget = _vmem_budget_bytes()
    tile_o = _pick_o_tile(O, M, B, C, budget)
    grid = (O // tile_o,)

    x_bs = pl.BlockSpec((C, B, M), lambda i: (0, 0, 0))
    w_bs = pl.BlockSpec((C, tile_o, M), lambda i: (0, i, 0))
    o_bs = pl.BlockSpec((B, tile_o, M), lambda i: (0, i, 0))

    flops = 8 * B * O * M * C                    # complex multiply-accumulate
    bytes_accessed = 4 * (2 * C * B * M + 2 * C * O * M + 2 * B * O * M)

    return pl.pallas_call(
        _spectral_mix_kernel,
        out_shape=(jax.ShapeDtypeStruct((B, O, M), jnp.float32),
                   jax.ShapeDtypeStruct((B, O, M), jnp.float32)),
        grid=grid,
        in_specs=[x_bs, x_bs, w_bs, w_bs],
        out_specs=(o_bs, o_bs),
        compiler_params=_mosaic_params(("parallel",),
                                       _spectral_footprint(B, C, M, tile_o)),
        cost_estimate=pl.CostEstimate(flops=flops, transcendentals=0,
                                      bytes_accessed=bytes_accessed),
    )(xr_cbm, xi_cbm, wr, wi)


# ---------------------------------------------------------------------------
# Kernel B: fused 1x1-conv skip + residual + exact GELU (channels-first)
#   out[b, o, n] = gelu( sum_c w[o, c] * x[b, c, n] + bias[o] + spec[b, o, n] )
# Spatial (H*W) tile on the lane axis; contraction on the MXU when C >= 16.
# ---------------------------------------------------------------------------
def _skip_footprint(C, O, tile):
    f32 = 4
    return ((C * tile + 2 * O * tile) * f32 * 2      # x, spec, out double-buffered
            + (O * C + O) * f32 * 2                  # weights + bias
            + O * tile * f32)                        # acc temp


def _pick_hw_tile(HW, C, O, budget, cap=8192):
    cands = [t for t in range(128, min(HW, cap) + 1, 128) if HW % t == 0]
    if not cands:
        # TODO(synk): pad HW to a 128 multiple instead of a lane-masked full block
        return HW
    fitting = [t for t in cands if _skip_footprint(C, O, t) <= budget]
    return max(fitting) if fitting else min(cands)


def _skip_fuse_kernel(x_ref, w_ref, b_ref, spec_ref, o_ref):
    x = x_ref[0]                              # (C, T)
    w = w_ref[...]                            # (O, C)
    C = x.shape[0]
    base = spec_ref[0] + b_ref[...]           # (O, T) + (O, 1)
    if C >= 16:
        # real widths: K=C contraction on the MXU, f32 accumulate
        acc = base + jnp.dot(w, x, preferred_element_type=jnp.float32)
    else:
        # tiny C (toy case): a K=4 matmul can't amortize the MXU, stay on VPU
        acc = base
        for c in range(C):
            acc = acc + w[:, c:c + 1] * x[c:c + 1, :]
    # TODO(synk): exact erf GELU kept for torch-default parity; tanh-approx
    # would move this to the (idle) EUP slot if looser numerics are acceptable.
    o_ref[0] = _gelu_exact(acc)


def skip_fuse(x3, w_oc, b_o1, spec3):
    """x3: (B, C, HW), w_oc: (O, C), b_o1: (O, 1), spec3: (B, O, HW) -> (B, O, HW)."""
    B, C, HW = x3.shape
    O = w_oc.shape[0]
    budget = _vmem_budget_bytes()
    tile = _pick_hw_tile(HW, C, O, budget)
    grid = (B, HW // tile)

    flops = 2 * B * O * C * HW + 8 * B * O * HW
    bytes_accessed = 4 * (B * C * HW + 2 * B * O * HW + O * C + O)

    return pl.pallas_call(
        _skip_fuse_kernel,
        out_shape=jax.ShapeDtypeStruct((B, O, HW), jnp.float32),
        grid=grid,
        in_specs=[
            pl.BlockSpec((1, C, tile), lambda b, j: (b, 0, j)),
            pl.BlockSpec((O, C), lambda b, j: (0, 0)),
            pl.BlockSpec((O, 1), lambda b, j: (0, 0)),
            pl.BlockSpec((1, O, tile), lambda b, j: (b, 0, j)),
        ],
        out_specs=pl.BlockSpec((1, O, tile), lambda b, j: (b, 0, j)),
        compiler_params=_mosaic_params(("parallel", "parallel"),
                                       _skip_footprint(C, O, tile)),
        cost_estimate=pl.CostEstimate(flops=flops,
                                      transcendentals=B * O * HW,
                                      bytes_accessed=bytes_accessed),
    )(x3, w_oc, b_o1, spec3)


# ---------------------------------------------------------------------------
# "main_module" (FNOBlocks-like) forward for one layer `index`
# ---------------------------------------------------------------------------
def make_params(key, n_layers, C, O, m1, m2):
    ks = jax.random.split(key, 6)
    scale = 1.0 / (C * O)
    shape = (n_layers, C, O, m1, m2)
    return dict(
        w1_r=scale * jax.random.normal(ks[0], shape, jnp.float32),
        w1_i=scale * jax.random.normal(ks[1], shape, jnp.float32),
        w2_r=scale * jax.random.normal(ks[2], shape, jnp.float32),
        w2_i=scale * jax.random.normal(ks[3], shape, jnp.float32),
        w_skip=(1.0 / math.sqrt(C)) *
               jax.random.normal(ks[4], (n_layers, C, O), jnp.float32),
        b_skip=0.1 * jax.random.normal(ks[5], (n_layers, O), jnp.float32),
    )


def fno_block_forward(params, x, index, n_modes):
    B, C, H, W = x.shape
    m1, m2 = n_modes
    assert H >= 2 * m1, "concat-based out_ft assembly requires H >= 2*m1"
    w1_r, w1_i = params["w1_r"][index], params["w1_i"][index]    # (C, O, m1, m2)
    w2_r, w2_i = params["w2_r"][index], params["w2_i"][index]
    O = w1_r.shape[1]
    Wf = W // 2 + 1
    M = 2 * m1 * m2

    # TODO(synk): rfft2/irfft2 stay in plain JAX -- no Pallas FFT primitive on TPU.
    x_ft = jnp.fft.rfft2(x.astype(jnp.float32), axes=(-2, -1))       # (B,C,H,Wf) c64
    top = x_ft[:, :, :m1, :m2].reshape(B, C, m1 * m2)
    bot = x_ft[:, :, H - m1:, :m2].reshape(B, C, m1 * m2)
    modes = jnp.concatenate([top, bot], axis=-1)                     # (B, C, M)
    modes = jnp.transpose(modes, (1, 0, 2))                          # (C, B, M)
    xr = jnp.real(modes).astype(jnp.float32)
    xi = jnp.imag(modes).astype(jnp.float32)

    # weights laid out (C, O, M); mode axis = [w1 block | w2 block]
    wr = jnp.concatenate([w1_r.reshape(C, O, m1 * m2),
                          w2_r.reshape(C, O, m1 * m2)], axis=-1)
    wi = jnp.concatenate([w1_i.reshape(C, O, m1 * m2),
                          w2_i.reshape(C, O, m1 * m2)], axis=-1)

    out_r, out_i = spectral_mix(xr, xi, wr, wi)                      # (B, O, M)
    out_modes = lax.complex(out_r, out_i).reshape(B, O, 2, m1, m2)

    # Build out_ft by concatenation / zero-padding (no zeros + scatter updates).
    top_blk = out_modes[:, :, 0]                                     # (B, O, m1, m2)
    bot_blk = out_modes[:, :, 1]
    mid = jnp.zeros((B, O, H - 2 * m1, m2), jnp.complex64)
    cols = jnp.concatenate([top_blk, mid, bot_blk], axis=2)          # (B, O, H, m2)
    right = jnp.zeros((B, O, H, Wf - m2), jnp.complex64)
    out_ft = jnp.concatenate([cols, right], axis=3)                  # (B, O, H, Wf)
    x_spec = jnp.fft.irfft2(out_ft, s=(H, W), axes=(-2, -1))         # (B, O, H, W) f32

    # Fused skip conv + residual + GELU, channels-first (no NCHW<->NHWC transposes).
    x3 = x.reshape(B, C, H * W).astype(jnp.float32)
    spec3 = x_spec.reshape(B, O, H * W)
    w_oc = params["w_skip"][index].T                                 # (O, C)
    b_o1 = params["b_skip"][index].reshape(O, 1)
    out3 = skip_fuse(x3, w_oc, b_o1, spec3)                          # (B, O, HW)
    return out3.reshape(B, O, H, W)                                  # NCHW


# ---------------------------------------------------------------------------
# SubModule: just delegates to main_module.forward(x, indices)
# ---------------------------------------------------------------------------
class SubModule:
    def __init__(self, main_module_forward, indices):
        self.main_module_forward = main_module_forward
        self.indices = indices

    def __call__(self, x):
        return self.main_module_forward(x, self.indices)


# ---------------------------------------------------------------------------
# Pure-JAX reference for correctness check
# ---------------------------------------------------------------------------
def fno_block_reference(params, x, index, n_modes):
    B, C, H, W = x.shape
    m1, m2 = n_modes
    w1 = params["w1_r"][index] + 1j * params["w1_i"][index]
    w2 = params["w2_r"][index] + 1j * params["w2_i"][index]
    O = w1.shape[1]
    x_ft = jnp.fft.rfft2(x.astype(jnp.float32), axes=(-2, -1))
    out_ft = jnp.zeros((B, O, H, W // 2 + 1), jnp.complex64)
    out_ft = out_ft.at[:, :, :m1, :m2].set(
        jnp.einsum("bixy,ioxy->boxy", x_ft[:, :, :m1, :m2], w1,
                   precision=lax.Precision.HIGHEST))
    out_ft = out_ft.at[:, :, H - m1:, :m2].set(
        jnp.einsum("bixy,ioxy->boxy", x_ft[:, :, H - m1:, :m2], w2,
                   precision=lax.Precision.HIGHEST))
    x_spec = jnp.fft.irfft2(out_ft, s=(H, W), axes=(-2, -1))
    skip = jnp.einsum("bchw,co->bohw", x, params["w_skip"][index],
                      precision=lax.Precision.HIGHEST) \
        + params["b_skip"][index][None, :, None, None]
    return _gelu_exact(x_spec + skip)


if __name__ == "__main__":
    B, C, O, H, W = 2, 4, 4, 16, 16
    n_layers, m1, m2 = 2, 4, 4
    index = 1  # which sub-module / layer the SubModule dispatches to

    key = jax.random.PRNGKey(0)
    pkey, xkey = jax.random.split(key)
    params = make_params(pkey, n_layers, C, O, m1, m2)
    x = jax.random.normal(xkey, (B, C, H, W), jnp.float32)

    main_forward = lambda inp, idx: fno_block_forward(params, inp, idx, (m1, m2))
    sub = SubModule(main_forward, indices=index)

    out = jax.jit(sub.__call__)(x)
    out = jax.block_until_ready(out)

    ref = fno_block_reference(params, x, index, (m1, m2))
    assert out.shape == (B, O, H, W), out.shape
    err = float(jnp.max(jnp.abs(out - ref)))
    assert err < 5e-4, f"max abs err {err}"
    print("KERNEL_OK")
</pallas_src>

<mosaic_0001>
module attributes {stable_mosaic.version = 11 : i64} {
  func.func @_spectral_mix_kernel(%arg0: i32, %arg1: memref<4x2x32xf32, #tpu.memory_space<vmem>>, %arg2: memref<4x2x32xf32, #tpu.memory_space<vmem>>, %arg3: memref<4x4x32xf32, #tpu.memory_space<vmem>>, %arg4: memref<4x4x32xf32, #tpu.memory_space<vmem>>, %arg5: memref<2x4x32xf32, #tpu.memory_space<vmem>>, %arg6: memref<2x4x32xf32, #tpu.memory_space<vmem>>) attributes {dimension_semantics = [#tpu.dimension_semantics<parallel>], iteration_bounds = array<i64: 1>, scalar_prefetch = 0 : i64, scratch_operands = 0 : i64, tpu.core_type = #tpu.core_type<tc>, window_params = [{pipeline_mode = #tpu.pipeline_mode<synchronous>, transform_indices = @transform_0, window_bounds = array<i64: 4, 2, 32>}, {pipeline_mode = #tpu.pipeline_mode<synchronous>, transform_indices = @transform_1, window_bounds = array<i64: 4, 2, 32>}, {transform_indices = @transform_2, window_bounds = array<i64: 4, 4, 32>}, {transform_indices = @transform_3, window_bounds = array<i64: 4, 4, 32>}, {transform_indices = @transform_4, window_bounds = array<i64: 2, 4, 32>}, {transform_indices = @transform_5, window_bounds = array<i64: 2, 4, 32>}]} {
    %cst = arith.constant 0.000000e+00 : f32
    %0 = vector.broadcast %cst : f32 to vector<2x4x32xf32>
    %cst_0 = arith.constant 0.000000e+00 : f32
    %1 = vector.broadcast %cst_0 : f32 to vector<2x4x32xf32>
    %c0 = arith.constant 0 : index
    %c0_1 = arith.constant 0 : index
    %c0_2 = arith.constant 0 : index
    %2 = vector.load %arg1[%c0, %c0_1, %c0_2] : memref<4x2x32xf32, #tpu.memory_space<vmem>>, vector<1x2x32xf32>
    %3 = vector.shape_cast %2 : vector<1x2x32xf32> to vector<2x32xf32>
    %4 = vector.shape_cast %3 : vector<2x32xf32> to vector<2x1x32xf32>
    %c0_3 = arith.constant 0 : index
    %c0_4 = arith.constant 0 : index
    %c0_5 = arith.constant 0 : index
    %5 = vector.load %arg2[%c0_3, %c0_4, %c0_5] : memref<4x2x32xf32, #tpu.memory_space<vmem>>, vector<1x2x32xf32>
    %6 = vector.shape_cast %5 : vector<1x2x32xf32> to vector<2x32xf32>
    %7 = vector.shape_cast %6 : vector<2x32xf32> to vector<2x1x32xf32>
    %c0_6 = arith.constant 0 : index
    %c0_7 = arith.constant 0 : index
    %c0_8 = arith.constant 0 : index
    %8 = vector.load %arg3[%c0_6, %c0_7, %c0_8] : memref<4x4x32xf32, #tpu.memory_space<vmem>>, vector<1x4x32xf32>
    %9 = vector.shape_cast %8 : vector<1x4x32xf32> to vector<4x32xf32>
    %10 = vector.shape_cast %9 : vector<4x32xf32> to vector<1x4x32xf32>
    %c0_9 = arith.constant 0 : index
    %c0_10 = arith.constant 0 : index
    %c0_11 = arith.constant 0 : index
    %11 = vector.load %arg4[%c0_9, %c0_10, %c0_11] : memref<4x4x32xf32, #tpu.memory_space<vmem>>, vector<1x4x32xf32>
    %12 = vector.shape_cast %11 : vector<1x4x32xf32> to vector<4x32xf32>
    %13 = vector.shape_cast %12 : vector<4x32xf32> to vector<1x4x32xf32>
    %14 = arith.addf %4, %7 : vector<2x1x32xf32>
    %15 = arith.subf %13, %10 : vector<1x4x32xf32>
    %16 = arith.addf %10, %13 : vector<1x4x32xf32>
    %17 = vector.broadcast %10 : vector<1x4x32xf32> to vector<2x4x32xf32>
    %18 = vector.broadcast %14 : vector<2x1x32xf32> to vector<2x4x32xf32>
    %19 = arith.mulf %17, %18 : vector<2x4x32xf32>
    %20 = vector.broadcast %4 : vector<2x1x32xf32> to vector<2x4x32xf32>
    %21 = vector.broadcast %15 : vector<1x4x32xf32> to vector<2x4x32xf32>
    %22 = arith.mulf %20, %21 : vector<2x4x32xf32>
    %23 = vector.broadcast %7 : vector<2x1x32xf32> to vector<2x4x32xf32>
    %24 = vector.broadcast %16 : vector<1x4x32xf32> to vector<2x4x32xf32>
    %25 = arith.mulf %23, %24 : vector<2x4x32xf32>
    %26 = arith.subf %19, %25 : vector<2x4x32xf32>
    %27 = arith.addf %0, %26 : vector<2x4x32xf32>
    %28 = arith.addf %19, %22 : vector<2x4x32xf32>
    %29 = arith.addf %1, %28 : vector<2x4x32xf32>
    %c1 = arith.constant 1 : index
    %c0_12 = arith.constant 0 : index
    %c0_13 = arith.constant 0 : index
    %30 = vector.load %arg1[%c1, %c0_12, %c0_13] : memref<4x2x32xf32, #tpu.memory_space<vmem>>, vector<1x2x32xf32>
    %31 = vector.shape_cast %30 : vector<1x2x32xf32> to vector<2x32xf32>
    %32 = vector.shape_cast %31 : vector<2x32xf32> to vector<2x1x32xf32>
    %c1_14 = arith.constant 1 : index
    %c0_15 = arith.constant 0 : index
    %c0_16 = arith.constant 0 : index
    %33 = vector.load %arg2[%c1_14, %c0_15, %c0_16] : memref<4x2x32xf32, #tpu.memory_space<vmem>>, vector<1x2x32xf32>
    %34 = vector.shape_cast %33 : vector<1x2x32xf32> to vector<2x32xf32>
    %35 = vector.shape_cast %34 : vector<2x32xf32> to vector<2x1x32xf32>
    %c1_17 = arith.constant 1 : index
    %c0_18 = arith.constant 0 : index
    %c0_19 = arith.constant 0 : index
    %36 = vector.load %arg3[%c1_17, %c0_18, %c0_19] : memref<4x4x32xf32, #tpu.memory_space<vmem>>, vector<1x4x32xf32>
    %37 = vector.shape_cast %36 : vector<1x4x32xf32> to vector<4x32xf32>
    %38 = vector.shape_cast %37 : vector<4x32xf32> to vector<1x4x32xf32>
    %c1_20 = arith.constant 1 : index
    %c0_21 = arith.constant 0 : index
    %c0_22 = arith.constant 0 : index
    %39 = vector.load %arg4[%c1_20, %c0_21, %c0_22] : memref<4x4x32xf32, #tpu.memory_space<vmem>>, vector<1x4x32xf32>
    %40 = vector.shape_cast %39 : vector<1x4x32xf32> to vector<4x32xf32>
    %41 = vector.shape_cast %40 : vector<4x32xf32> to vector<1x4x32xf32>
    %42 = arith.addf %32, %35 : vector<2x1x32xf32>
    %43 = arith.subf %41, %38 : vector<1x4x32xf32>
    %44 = arith.addf %38, %41 : vector<1x4x32xf32>
    %45 = vector.broadcast %38 : vector<1x4x32xf32> to vector<2x4x32xf32>
    %46 = vector.broadcast %42 : vector<2x1x32xf32> to vector<2x4x32xf32>
    %47 = arith.mulf %45, %46 : vector<2x4x32xf32>
    %48 = vector.broadcast %32 : vector<2x1x32xf32> to vector<2x4x32xf32>
    %49 = vector.broadcast %43 : vector<1x4x32xf32> to vector<2x4x32xf32>
    %50 = arith.mulf %48, %49 : vector<2x4x32xf32>
    %51 = vector.broadcast %35 : vector<2x1x32xf32> to vector<2x4x32xf32>
    %52 = vector.broadcast %44 : vector<1x4x32xf32> to vector<2x4x32xf32>
    %53 = arith.mulf %51, %52 : vector<2x4x32xf32>
    %54 = arith.subf %47, %53 : vector<2x4x32xf32>
    %55 = arith.addf %27, %54 : vector<2x4x32xf32>
    %56 = arith.addf %47, %50 : vector<2x4x32xf32>
    %57 = arith.addf %29, %56 : vector<2x4x32xf32>
    %c2 = arith.constant 2 : index
    %c0_23 = arith.constant 0 : index
    %c0_24 = arith.constant 0 : index
    %58 = vector.load %arg1[%c2, %c0_23, %c0_24] : memref<4x2x32xf32, #tpu.memory_space<vmem>>, vector<1x2x32xf32>
    %59 = vector.shape_cast %58 : vector<1x2x32xf32> to vector<2x32xf32>
    %60 = vector.shape_cast %59 : vector<2x32xf32> to vector<2x1x32xf32>
    %c2_25 = arith.constant 2 : index
    %c0_26 = arith.constant 0 : index
    %c0_27 = arith.constant 0 : index
    %61 = vector.load %arg2[%c2_25, %c0_26, %c0_27] : memref<4x2x32xf32, #tpu.memory_space<vmem>>, vector<1x2x32xf32>
    %62 = vector.shape_cast %61 : vector<1x2x32xf32> to vector<2x32xf32>
    %63 = vector.shape_cast %62 : vector<2x32xf32> to vector<2x1x32xf32>
    %c2_28 = arith.constant 2 : index
    %c0_29 = arith.constant 0 : index
    %c0_30 = arith.constant 0 : index
    %64 = vector.load %arg3[%c2_28, %c0_29, %c0_30] : memref<4x4x32xf32, #tpu.memory_space<vmem>>, vector<1x4x32xf32>
    %65 = vector.shape_cast %64 : vector<1x4x32xf32> to vector<4x32xf32>
    %66 = vector.shape_cast %65 : vector<4x32xf32> to vector<1x4x32xf32>
    %c2_31 = arith.constant 2 : index
    %c0_32 = arith.constant 0 : index
    %c0_33 = arith.constant 0 : index
    %67 = vector.load %arg4[%c2_31, %c0_32, %c0_33] : memref<4x4x32xf32, #tpu.memory_space<vmem>>, vector<1x4x32xf32>
    %68 = vector.shape_cast %67 : vector<1x4x32xf32> to vector<4x32xf32>
    %69 = vector.shape_cast %68 : vector<4x32xf32> to vector<1x4x32xf32>
    %70 = arith.addf %60, %63 : vector<2x1x32xf32>
    %71 = arith.subf %69, %66 : vector<1x4x32xf32>
    %72 = arith.addf %66, %69 : vector<1x4x32xf32>
    %73 = vector.broadcast %66 : vector<1x4x32xf32> to vector<2x4x32xf32>
    %74 = vector.broadcast %70 : vector<2x1x32xf32> to vector<2x4x32xf32>
    %75 = arith.mulf %73, %74 : vector<2x4x32xf32>
    %76 = vector.broadcast %60 : vector<2x1x32xf32> to vector<2x4x32xf32>
    %77 = vector.broadcast %71 : vector<1x4x32xf32> to vector<2x4x32xf32>
    %78 = arith.mulf %76, %77 : vector<2x4x32xf32>
    %79 = vector.broadcast %63 : vector<2x1x32xf32> to vector<2x4x32xf32>
    %80 = vector.broadcast %72 : vector<1x4x32xf32> to vector<2x4x32xf32>
    %81 = arith.mulf %79, %80 : vector<2x4x32xf32>
    %82 = arith.subf %75, %81 : vector<2x4x32xf32>
    %83 = arith.addf %55, %82 : vector<2x4x32xf32>
    %84 = arith.addf %75, %78 : vector<2x4x32xf32>
    %85 = arith.addf %57, %84 : vector<2x4x32xf32>
    %c3 = arith.constant 3 : index
    %c0_34 = arith.constant 0 : index
    %c0_35 = arith.constant 0 : index
    %86 = vector.load %arg1[%c3, %c0_34, %c0_35] : memref<4x2x32xf32, #tpu.memory_space<vmem>>, vector<1x2x32xf32>
    %87 = vector.shape_cast %86 : vector<1x2x32xf32> to vector<2x32xf32>
    %88 = vector.shape_cast %87 : vector<2x32xf32> to vector<2x1x32xf32>
    %c3_36 = arith.constant 3 : index
    %c0_37 = arith.constant 0 : index
    %c0_38 = arith.constant 0 : index
    %89 = vector.load %arg2[%c3_36, %c0_37, %c0_38] : memref<4x2x32xf32, #tpu.memory_space<vmem>>, vector<1x2x32xf32>
    %90 = vector.shape_cast %89 : vector<1x2x32xf32> to vector<2x32xf32>
    %91 = vector.shape_cast %90 : vector<2x32xf32> to vector<2x1x32xf32>
    %c3_39 = arith.constant 3 : index
    %c0_40 = arith.constant 0 : index
    %c0_41 = arith.constant 0 : index
    %92 = vector.load %arg3[%c3_39, %c0_40, %c0_41] : memref<4x4x32xf32, #tpu.memory_space<vmem>>, vector<1x4x32xf32>
    %93 = vector.shape_cast %92 : vector<1x4x32xf32> to vector<4x32xf32>
    %94 = vector.shape_cast %93 : vector<4x32xf32> to vector<1x4x32xf32>
    %c3_42 = arith.constant 3 : index
    %c0_43 = arith.constant 0 : index
    %c0_44 = arith.constant 0 : index
    %95 = vector.load %arg4[%c3_42, %c0_43, %c0_44] : memref<4x4x32xf32, #tpu.memory_space<vmem>>, vector<1x4x32xf32>
    %96 = vector.shape_cast %95 : vector<1x4x32xf32> to vector<4x32xf32>
    %97 = vector.shape_cast %96 : vector<4x32xf32> to vector<1x4x32xf32>
    %98 = arith.addf %88, %91 : vector<2x1x32xf32>
    %99 = arith.subf %97, %94 : vector<1x4x32xf32>
    %100 = arith.addf %94, %97 : vector<1x4x32xf32>
    %101 = vector.broadcast %94 : vector<1x4x32xf32> to vector<2x4x32xf32>
    %102 = vector.broadcast %98 : vector<2x1x32xf32> to vector<2x4x32xf32>
    %103 = arith.mulf %101, %102 : vector<2x4x32xf32>
    %104 = vector.broadcast %88 : vector<2x1x32xf32> to vector<2x4x32xf32>
    %105 = vector.broadcast %99 : vector<1x4x32xf32> to vector<2x4x32xf32>
    %106 = arith.mulf %104, %105 : vector<2x4x32xf32>
    %107 = vector.broadcast %91 : vector<2x1x32xf32> to vector<2x4x32xf32>
    %108 = vector.broadcast %100 : vector<1x4x32xf32> to vector<2x4x32xf32>
    %109 = arith.mulf %107, %108 : vector<2x4x32xf32>
    %110 = arith.subf %103, %109 : vector<2x4x32xf32>
    %111 = arith.addf %83, %110 : vector<2x4x32xf32>
    %112 = arith.addf %103, %106 : vector<2x4x32xf32>
    %113 = arith.addf %85, %112 : vector<2x4x32xf32>
    %c0_45 = arith.constant 0 : index
    %c0_46 = arith.constant 0 : index
    %c0_47 = arith.constant 0 : index
    %114 = vector.load %arg5[%c0_45, %c0_46, %c0_47] : memref<2x4x32xf32, #tpu.memory_space<vmem>>, vector<2x4x32xf32>
    tpu.vector_store %arg5[%c0_45, %c0_46, %c0_47], %111 {strides = array<i32>} : memref<2x4x32xf32, #tpu.memory_space<vmem>>, vector<2x4x32xf32>,
    %c0_48 = arith.constant 0 : index
    %c0_49 = arith.constant 0 : index
    %c0_50 = arith.constant 0 : index
    %115 = vector.load %arg6[%c0_48, %c0_49, %c0_50] : memref<2x4x32xf32, #tpu.memory_space<vmem>>, vector<2x4x32xf32>
    tpu.vector_store %arg6[%c0_48, %c0_49, %c0_50], %113 {strides = array<i32>} : memref<2x4x32xf32, #tpu.memory_space<vmem>>, vector<2x4x32xf32>,
    return
  }
  func.func @transform_0(%arg0: i32) -> (i32, i32, i32) {
    %c0_i32 = arith.constant 0 : i32
    %c0_i32_0 = arith.constant 0 : i32
    %c0_i32_1 = arith.constant 0 : i32
    %c0_i32_2 = arith.constant 0 : i32
    return %c0_i32, %c0_i32_0, %c0_i32_1 : i32, i32, i32
  }
  func.func @transform_1(%arg0: i32) -> (i32, i32, i32) {
    %c0_i32 = arith.constant 0 : i32
    %c0_i32_0 = arith.constant 0 : i32
    %c0_i32_1 = arith.constant 0 : i32
    %c0_i32_2 = arith.constant 0 : i32
    return %c0_i32, %c0_i32_0, %c0_i32_1 : i32, i32, i32
  }
  func.func @transform_2(%arg0: i32) -> (i32, i32, i32) {
    %c0_i32 = arith.constant 0 : i32
    %c0_i32_0 = arith.constant 0 : i32
    %c0_i32_1 = arith.constant 0 : i32
    return %c0_i32, %arg0, %c0_i32_0 : i32, i32, i32
  }
  func.func @transform_3(%arg0: i32) -> (i32, i32, i32) {
    %c0_i32 = arith.constant 0 : i32
    %c0_i32_0 = arith.constant 0 : i32
    %c0_i32_1 = arith.constant 0 : i32
    return %c0_i32, %arg0, %c0_i32_0 : i32, i32, i32
  }
  func.func @transform_4(%arg0: i32) -> (i32, i32, i32) {
    %c0_i32 = arith.constant 0 : i32
    %c0_i32_0 = arith.constant 0 : i32
    %c0_i32_1 = arith.constant 0 : i32
    return %c0_i32, %arg0, %c0_i32_0 : i32, i32, i32
  }
  func.func @transform_5(%arg0: i32) -> (i32, i32, i32) {
    %c0_i32 = arith.constant 0 : i32
    %c0_i32_0 = arith.constant 0 : i32
    %c0_i32_1 = arith.constant 0 : i32
    return %c0_i32, %arg0, %c0_i32_0 : i32, i32, i32
  }
}

module attributes {stable_mosaic.version = 11 : i64} {
  func.func @_skip_fuse_kernel(%arg0: i32, %arg1: i32, %arg2: memref<1x4x256xf32, #tpu.memory_space<vmem>>, %arg3: memref<4x4xf32, #tpu.memory_space<vmem>>, %arg4: memref<4x1xf32, #tpu.memory_space<vmem>>, %arg5: memref<1x4x256xf32, #tpu.memory_space<vmem>>, %arg6: memref<1x4x256xf32, #tpu.memory_space<vmem>>) attributes {dimension_semantics = [#tpu.dimension_semantics<parallel>, #tpu.dimension_semantics<parallel>], iteration_bounds = array<i64: 2, 1>, scalar_prefetch = 0 : i64, scratch_operands = 0 : i64, tpu.core_type = #tpu.core_type<tc>, window_params = [{transform_indices = @transform_0, window_bounds = array<i64: 1, 4, 256>}, {pipeline_mode = #tpu.pipeline_mode<synchronous>, transform_indices = @transform_1, window_bounds = array<i64: 4, 4>}, {pipeline_mode = #tpu.pipeline_mode<synchronous>, transform_indices = @transform_2, window_bounds = array<i64: 4, 1>}, {transform_indices = @transform_3, window_bounds = array<i64: 1, 4, 256>}, {transform_indices = @transform_4, window_bounds = array<i64: 1, 4, 256>}]} {
    %c0 = arith.constant 0 : index
    %c0_0 = arith.constant 0 : index
    %c0_1 = arith.constant 0 : index
    %0 = vector.load %arg2[%c0, %c0_0, %c0_1] : memref<1x4x256xf32, #tpu.memory_space<vmem>>, vector<1x4x256xf32>
    %1 = vector.shape_cast %0 : vector<1x4x256xf32> to vector<4x256xf32>
    %c0_2 = arith.constant 0 : index
    %c0_3 = arith.constant 0 : index
    %2 = vector.load %arg3[%c0_2, %c0_3] : memref<4x4xf32, #tpu.memory_space<vmem>>, vector<4x4xf32>
    %c0_4 = arith.constant 0 : index
    %c0_5 = arith.constant 0 : index
    %c0_6 = arith.constant 0 : index
    %3 = vector.load %arg5[%c0_4, %c0_5, %c0_6] : memref<1x4x256xf32, #tpu.memory_space<vmem>>, vector<1x4x256xf32>
    %4 = vector.shape_cast %3 : vector<1x4x256xf32> to vector<4x256xf32>
    %c0_7 = arith.constant 0 : index
    %c0_8 = arith.constant 0 : index
    %5 = vector.load %arg4[%c0_7, %c0_8] : memref<4x1xf32, #tpu.memory_space<vmem>>, vector<4x1xf32>
    %6 = vector.broadcast %5 : vector<4x1xf32> to vector<4x256xf32>
    %7 = arith.addf %4, %6 : vector<4x256xf32>
    %8 = vector.extract_strided_slice %2 {offsets = [0, 0], sizes = [4, 1], strides = [1, 1]} : vector<4x4xf32> to vector<4x1xf32>
    %9 = vector.extract_strided_slice %1 {offsets = [0, 0], sizes = [1, 256], strides = [1, 1]} : vector<4x256xf32> to vector<1x256xf32>
    %10 = vector.broadcast %8 : vector<4x1xf32> to vector<4x256xf32>
    %11 = vector.broadcast %9 : vector<1x256xf32> to vector<4x256xf32>
    %12 = arith.mulf %10, %11 : vector<4x256xf32>
    %13 = arith.addf %7, %12 : vector<4x256xf32>
    %14 = vector.extract_strided_slice %2 {offsets = [0, 1], sizes = [4, 1], strides = [1, 1]} : vector<4x4xf32> to vector<4x1xf32>
    %15 = vector.extract_strided_slice %1 {offsets = [1, 0], sizes = [1, 256], strides = [1, 1]} : vector<4x256xf32> to vector<1x256xf32>
    %16 = vector.broadcast %14 : vector<4x1xf32> to vector<4x256xf32>
    %17 = vector.broadcast %15 : vector<1x256xf32> to vector<4x256xf32>
    %18 = arith.mulf %16, %17 : vector<4x256xf32>
    %19 = arith.addf %13, %18 : vector<4x256xf32>
    %20 = vector.extract_strided_slice %2 {offsets = [0, 2], sizes = [4, 1], strides = [1, 1]} : vector<4x4xf32> to vector<4x1xf32>
    %21 = vector.extract_strided_slice %1 {offsets = [2, 0], sizes = [1, 256], strides = [1, 1]} : vector<4x256xf32> to vector<1x256xf32>
    %22 = vector.broadcast %20 : vector<4x1xf32> to vector<4x256xf32>
    %23 = vector.broadcast %21 : vector<1x256xf32> to vector<4x256xf32>
    %24 = arith.mulf %22, %23 : vector<4x256xf32>
    %25 = arith.addf %19, %24 : vector<4x256xf32>
    %26 = vector.extract_strided_slice %2 {offsets = [0, 3], sizes = [4, 1], strides = [1, 1]} : vector<4x4xf32> to vector<4x1xf32>
    %27 = vector.extract_strided_slice %1 {offsets = [3, 0], sizes = [1, 256], strides = [1, 1]} : vector<4x256xf32> to vector<1x256xf32>
    %28 = vector.broadcast %26 : vector<4x1xf32> to vector<4x256xf32>
    %29 = vector.broadcast %27 : vector<1x256xf32> to vector<4x256xf32>
    %30 = arith.mulf %28, %29 : vector<4x256xf32>
    %31 = arith.addf %25, %30 : vector<4x256xf32>
    %cst = arith.constant 5.000000e-01 : f32
    %32 = vector.broadcast %cst : f32 to vector<4x256xf32>
    %33 = arith.mulf %32, %31 : vector<4x256xf32>
    %cst_9 = arith.constant 0.707106769 : f32
    %34 = vector.broadcast %cst_9 : f32 to vector<4x256xf32>
    %35 = arith.mulf %31, %34 : vector<4x256xf32>
    %36 = math.erf %35 : vector<4x256xf32>
    %cst_10 = arith.constant 1.000000e+00 : f32
    %37 = vector.broadcast %cst_10 : f32 to vector<4x256xf32>
    %38 = arith.addf %37, %36 : vector<4x256xf32>
    %39 = arith.mulf %33, %38 : vector<4x256xf32>
    %c0_11 = arith.constant 0 : index
    %c0_12 = arith.constant 0 : index
    %c0_13 = arith.constant 0 : index
    %40 = vector.load %arg6[%c0_11, %c0_12, %c0_13] : memref<1x4x256xf32, #tpu.memory_space<vmem>>, vector<1x4x256xf32>
    %41 = vector.shape_cast %40 : vector<1x4x256xf32> to vector<4x256xf32>
    %42 = vector.shape_cast %39 : vector<4x256xf32> to vector<1x4x256xf32>
    tpu.vector_store %arg6[%c0_11, %c0_12, %c0_13], %42 {strides = array<i32>} : memref<1x4x256xf32, #tpu.memory_space<vmem>>, vector<1x4x256xf32>,
    return
  }
  func.func @transform_0(%arg0: i32, %arg1: i32) -> (i32, i32, i32) {
    %c0_i32 = arith.constant 0 : i32
    %c0_i32_0 = arith.constant 0 : i32
    return %arg0, %c0_i32, %arg1 : i32, i32, i32
  }
  func.func @transform_1(%arg0: i32, %arg1: i32) -> (i32, i32) {
    %c0_i32 = arith.constant 0 : i32
    %c0_i32_0 = arith.constant 0 : i32
    %c0_i32_1 = arith.constant 0 : i32
    return %c0_i32, %c0_i32_0 : i32, i32
  }
  func.func @transform_2(%arg0: i32, %arg1: i32) -> (i32, i32) {
    %c0_i32 = arith.constant 0 : i32
    %c0_i32_0 = arith.constant 0 : i32
    %c0_i32_1 = arith.constant 0 : i32
    return %c0_i32, %c0_i32_0 : i32, i32
  }
  func.func @transform_3(%arg0: i32, %arg1: i32) -> (i32, i32, i32) {
    %c0_i32 = arith.constant 0 : i32
    %c0_i32_0 = arith.constant 0 : i32
    return %arg0, %c0_i32, %arg1 : i32, i32, i32
  }
  func.func @transform_4(%arg0: i32, %arg1: i32) -> (i32, i32, i32) {
    %c0_i32 = arith.constant 0 : i32
    %c0_i32_0 = arith.constant 0 : i32
    return %arg0, %c0_i32, %arg1 : i32, i32, i32
  }
}

</mosaic_0001>

<llo_original>
// kernel: reverse.0
$region0: #{reverse.0}
  %s0 = inlined_call_operand.vmem [shape: f32[2,4,16,7], index: 0, kind: input, shape index: {}]
  %s1 = inlined_call_operand.vmem [shape: f32[2,4,16,7], index: 1, kind: output, shape index: {}]
  $region1: #{reverse.0} parent=0
    #allocation0 [shape = 'u8[65536]{0}', space=vmem, size = 0x10000, scoped, tag = 'operand span for operand 0']
    #allocation1 [shape = 'u8[32768]{0}', space=vmem, size = 0x8000, scoped, tag = 'operand span for operand 1']
    %s2 = scalar_lea.vmem [#allocation0], 8
    // Predicated region
    $region2: #{reverse.0} parent=1 // pred_check
      _
    $region3: #{reverse.0} parent=1 // pred_check_branch
      %4 = sbr.rel (0) target = $region5
    $region4: #{reverse.0} parent=1 // pred_region
      // Predicated region
      $region6: #{reverse.0} parent=4 // pred_check
        _
      $region7: #{reverse.0} parent=4 // pred_check_branch
        %6 = sbr.rel (0) target = $region9
      $region8: #{reverse.0} parent=4 // pred_region
        // Predicated region
        $region21: #{reverse.0} parent=8 // pred_check
          _
        $region22: #{reverse.0} parent=8 // pred_check_branch
          %36 = sbr.rel (0) target = $region24
        $region23: #{reverse.0} parent=8 // pred_region
          loop: start=0, step=1, limit=1
          $region25: #{reverse.0} parent=23 // loop_pre_header
            _
          $region26: #{reverse.0} parent=23 // loop_header
            %s38 = sphi 0, %s42
            %p39 = scmp.ge.s32.totalorder %s38, 1
            %s43 = sphi %s0, %s0
            %s44 = sphi %s2, %s2
          $region27: #{reverse.0} parent=23 // loop_header_branch
            %41 = sbr.rel (%p39) target = $region31
          $region28: #{reverse.0} parent=23 // loop_body
            %v45 = vld [vmem:[%s43] sm:$0xff]
            %46 = vst [vmem:[%s44] sm:$0xff] %v45
            %v47 = vld [vmem:[%s43 + $0x8] sm:$0xff]
            %48 = vst [vmem:[%s44 + $0x10] sm:$0xff] %v47
            %v49 = vld [vmem:[%s43 + $0x10] sm:$0xff]
            %50 = vst [vmem:[%s44 + $0x20] sm:$0xff] %v49
            %v51 = vld [vmem:[%s43 + $0x18] sm:$0xff]
            %52 = vst [vmem:[%s44 + $0x30] sm:$0xff] %v51
            %v53 = vld [vmem:[%s43 + $0x20] sm:$0xff]
            %54 = vst [vmem:[%s44 + $0x40] sm:$0xff] %v53
            %v55 = vld [vmem:[%s43 + $0x28] sm:$0xff]
            %56 = vst [vmem:[%s44 + $0x50] sm:$0xff] %v55
            %v57 = vld [vmem:[%s43 + $0x30] sm:$0xff]
            %58 = vst [vmem:[%s44 + $0x60] sm:$0xff] %v57
            %v59 = vld [vmem:[%s43 + $0x38] sm:$0xff]
            %60 = vst [vmem:[%s44 + $0x70] sm:$0xff] %v59
          $region29: #{reverse.0} parent=23 // loop_footer
            %s42 = sadd.s32 1, %s38
          $region30: #{reverse.0} parent=23 // loop_footer_branch
            %37 = sbr.rel target = $region26
          $region31: #{reverse.0} parent=23 // loop_exit
            _
        $region24: #{reverse.0} parent=8 // pred_fallthru
          _
        // Predicated region
        $region32: #{reverse.0} parent=8 // pred_check
          _
        $region33: #{reverse.0} parent=8 // pred_check_branch
          %62 = sbr.rel target = $region35
        $region34: #{reverse.0} parent=8 // pred_region
          _
        $region35: #{reverse.0} parent=8 // pred_fallthru
          _
      $region9: #{reverse.0} parent=4 // pred_fallthru
        _
      // Predicated region
      $region10: #{reverse.0} parent=4 // pred_check
        _
      $region11: #{reverse.0} parent=4 // pred_check_branch
        %8 = sbr.rel target = $region13
      $region12: #{reverse.0} parent=4 // pred_region
        %s10 = ssub.s32 256, 1
        loop: start=0, step=1, limit=1
        $region14: #{reverse.0} parent=12 // loop_pre_header
          _
        $region15: #{reverse.0} parent=12 // loop_header
          %s12 = sphi 0, %s16
          %p13 = scmp.ge.s32.totalorder %s12, 1
          %s17 = sphi %s0, %s0
          %s18 = sphi %s2, %s2
        $region16: #{reverse.0} parent=12 // loop_header_branch
          %15 = sbr.rel (%p13) target = $region20
        $region17: #{reverse.0} parent=12 // loop_body
          %v19 = vld [vmem:[%s17] sm:%s10]
          %20 = vst [vmem:[%s18] sm:%s10] %v19
          %v21 = vld [vmem:[%s17 + $0x8] sm:%s10]
          %22 = vst [vmem:[%s18 + $0x10] sm:%s10] %v21
          %v23 = vld [vmem:[%s17 + $0x10] sm:%s10]
          %24 = vst [vmem:[%s18 + $0x20] sm:%s10] %v23
          %v25 = vld [vmem:[%s17 + $0x18] sm:%s10]
          %26 = vst [vmem:[%s18 + $0x30] sm:%s10] %v25
          %v27 = vld [vmem:[%s17 + $0x20] sm:%s10]
          %28 = vst [vmem:[%s18 + $0x40] sm:%s10] %v27
          %v29 = vld [vmem:[%s17 + $0x28] sm:%s10]
          %30 = vst [vmem:[%s18 + $0x50] sm:%s10] %v29
          %v31 = vld [vmem:[%s17 + $0x30] sm:%s10]
          %32 = vst [vmem:[%s18 + $0x60] sm:%s10] %v31
          %v33 = vld [vmem:[%s17 + $0x38] sm:%s10]
          %34 = vst [vmem:[%s18 + $0x70] sm:%s10] %v33
        $region18: #{reverse.0} parent=12 // loop_footer
          %s16 = sadd.s32 1, %s12
        $region19: #{reverse.0} parent=12 // loop_footer_branch
          %11 = sbr.rel target = $region15
        $region20: #{reverse.0} parent=12 // loop_exit
          _
      $region13: #{reverse.0} parent=4 // pred_fallthru
        _
    $region5: #{reverse.0} parent=1 // pred_fallthru
      _
    %63 = vnop
    %s64 = scalar_lea.vmem [#allocation0], 7
    %v65 = vld [vmem:[%s64] ss:$-1 sm:$0xff]
    %v66 = vrot.slane %v65, 1
    %67 = vst [vmem:[#allocation1] sm:$0xff] %v66
    %s68 = scalar_lea.vmem [#allocation0], 8
    %s69 = scalar_lea.vmem %s68, 7 [#allocation0]
    %v70 = vld [vmem:[%s69] ss:$-1 sm:$0xff]
    %v71 = vrot.slane %v70, 1
    %v72 = vlaneseq
    %v73 = vshrl.u32 %v72, 7
    %vm74 = vcmp.lt.s32.totalorder %v73, 7
    %75 = vst.msk [vmem:[#allocation1] sm:$0xff] %vm74, %v71
    %s76 = scalar_lea.vmem [#allocation1], 8
    %s77 = scalar_lea.vmem [#allocation0], 16
    %s78 = scalar_lea.vmem %s77, 7 [#allocation0]
    %v79 = vld [vmem:[%s78] ss:$-1 sm:$0xff]
    %v80 = vrot.slane %v79, 1
    %81 = vst [vmem:[%s76] sm:$0xff] %v80
    %s82 = scalar_lea.vmem %s77, 8 [#allocation0]
    %s83 = scalar_lea.vmem %s82, 7 [#allocation0]
    %v84 = vld [vmem:[%s83] ss:$-1 sm:$0xff]
    %v85 = vrot.slane %v84, 1
    %v86 = vlaneseq
    %v87 = vshrl.u32 %v86, 7
    %vm88 = vcmp.lt.s32.totalorder %v87, 7
    %89 = vst.msk [vmem:[%s76] sm:$0xff] %vm88, %v85
    %s90 = scalar_lea.vmem [#allocation1], 16
    %s91 = scalar_lea.vmem [#allocation0], 32
    %s92 = scalar_lea.vmem %s91, 7 [#allocation0]
    %v93 = vld [vmem:[%s92] ss:$-1 sm:$0xff]
    %v94 = vrot.slane %v93, 1
    %95 = vst [vmem:[%s90] sm:$0xff] %v94
    %s96 = scalar_lea.vmem %s91, 8 [#allocation0]
    %s97 = scalar_lea.vmem %s96, 7 [#allocation0]
    %v98 = vld [vmem:[%s97] ss:$-1 sm:$0xff]
    %v99 = vrot.slane %v98, 1
    %v100 = vlaneseq
    %v101 = vshrl.u32 %v100, 7
    %vm102 = vcmp.lt.s32.totalorder %v101, 7
    %103 = vst.msk [vmem:[%s90] sm:$0xff] %vm102, %v99
    %s104 = scalar_lea.vmem [#allocation1], 24
    %s105 = scalar_lea.vmem [#allocation0], 48
    %s106 = scalar_lea.vmem %s105, 7 [#allocation0]
    %v107 = vld [vmem:[%s106] ss:$-1 sm:$0xff]
    %v108 = vrot.slane %v107, 1
    %109 = vst [vmem:[%s104] sm:$0xff] %v108
    %s110 = scalar_lea.vmem %s105, 8 [#allocation0]
    %s111 = scalar_lea.vmem %s110, 7 [#allocation0]
    %v112 = vld [vmem:[%s111] ss:$-1 sm:$0xff]
    %v113 = vrot.slane %v112, 1
    %v114 = vlaneseq
    %v115 = vshrl.u32 %v114, 7
    %vm116 = vcmp.lt.s32.totalorder %v115, 7
    %117 = vst.msk [vmem:[%s104] sm:$0xff] %vm116, %v113
    %s118 = scalar_lea.vmem [#allocation1], 32
    %s119 = scalar_lea.vmem [#allocation0], 64
    %s120 = scalar_lea.vmem %s119, 7 [#allocation0]
    %v121 = vld [vmem:[%s120] ss:$-1 sm:$0xff]
    %v122 = vrot.slane %v121, 1
    %123 = vst [vmem:[%s118] sm:$0xff] %v122
    %s124 = scalar_lea.vmem %s119, 8 [#allocation0]
    %s125 = scalar_lea.vmem %s124, 7 [#allocation0]
    %v126 = vld [vmem:[%s125] ss:$-1 sm:$0xff]
    %v127 = vrot.slane %v126, 1
    %v128 = vlaneseq
    %v129 = vshrl.u32 %v128, 7
    %vm130 = vcmp.lt.s32.totalorder %v129, 7
    %131 = vst.msk [vmem:[%s118] sm:$0xff] %vm130, %v127
    %s132 = scalar_lea.vmem [#allocation1], 40
    %s133 = scalar_lea.vmem [#allocation0], 80
    %s134 = scalar_lea.vmem %s133, 7 [#allocation0]
    %v135 = vld [vmem:[%s134] ss:$-1 sm:$0xff]
    %v136 = vrot.slane %v135, 1
    %137 = vst [vmem:[%s132] sm:$0xff] %v136
    %s138 = scalar_lea.vmem %s133, 8 [#allocation0]
    %s139 = scalar_lea.vmem %s138, 7 [#allocation0]
    %v140 = vld [vmem:[%s139] ss:$-1 sm:$0xff]
    %v141 = vrot.slane %v140, 1
    %v142 = vlaneseq
    %v143 = vshrl.u32 %v142, 7
    %vm144 = vcmp.lt.s32.totalorder %v143, 7
    %145 = vst.msk [vmem:[%s132] sm:$0xff] %vm144, %v141
    %s146 = scalar_lea.vmem [#allocation1], 48
    %s147 = scalar_lea.vmem [#allocation0], 96
    %s148 = scalar_lea.vmem %s147, 7 [#allocation0]
    %v149 = vld [vmem:[%s148] ss:$-1 sm:$0xff]
    %v150 = vrot.slane %v149, 1
    %151 = vst [vmem:[%s146] sm:$0xff] %v150
    %s152 = scalar_lea.vmem %s147, 8 [#allocation0]
    %s153 = scalar_lea.vmem %s152, 7 [#allocation0]
    %v154 = vld [vmem:[%s153] ss:$-1 sm:$0xff]
    %v155 = vrot.slane %v154, 1
    %v156 = vlaneseq
    %v157 = vshrl.u32 %v156, 7
    %vm158 = vcmp.lt.s32.totalorder %v157, 7
    %159 = vst.msk [vmem:[%s146] sm:$0xff] %vm158, %v155
    %s160 = scalar_lea.vmem [#allocation1], 56
    %s161 = scalar_lea.vmem [#allocation0], 112
    %s162 = scalar_lea.vmem %s161, 7 [#allocation0]
    %v163 = vld [vmem:[%s162] ss:$-1 sm:$0xff]
    %v164 = vrot.slane %v163, 1
    %165 = vst [vmem:[%s160] sm:$0xff] %v164
    %s166 = scalar_lea.vmem %s161, 8 [#allocation0]
    %s167 = scalar_lea.vmem %s166, 7 [#allocation0]
    %v168 = vld [vmem:[%s167] ss:$-1 sm:$0xff]
    %v169 = vrot.slane %v168, 1
    %v170 = vlaneseq
    %v171 = vshrl.u32 %v170, 7
    %vm172 = vcmp.lt.s32.totalorder %v171, 7
    %173 = vst.msk [vmem:[%s160] sm:$0xff] %vm172, %v169
    // Predicated region
    $region36: #{reverse.0} parent=1 // pred_check
      _
    $region37: #{reverse.0} parent=1 // pred_check_branch
      %175 = sbr.rel (0) target = $region39
    $region38: #{reverse.0} parent=1 // pred_region
      // Predicated region
      $region40: #{reverse.0} parent=38 // pred_check
        _
      $region41: #{reverse.0} parent=38 // pred_check_branch
        %177 = sbr.rel (0) target = $region43
      $region42: #{reverse.0} parent=38 // pred_region
        // Predicated region
        $region55: #{reverse.0} parent=42 // pred_check
          _
        $region56: #{reverse.0} parent=42 // pred_check_branch
          %207 = sbr.rel (0) target = $region58
        $region57: #{reverse.0} parent=42 // pred_region
          loop: start=0, step=1, limit=1
          $region59: #{reverse.0} parent=57 // loop_pre_header
            _
          $region60: #{reverse.0} parent=57 // loop_header
            %s209 = sphi 0, %s213
            %p210 = scmp.ge.s32.totalorder %s209, 1
            %s214 = sphi [#allocation1], [#allocation1]
            %s215 = sphi %s1, %s1
          $region61: #{reverse.0} parent=57 // loop_header_branch
            %212 = sbr.rel (%p210) target = $region65
          $region62: #{reverse.0} parent=57 // loop_body
            %v216 = vld [vmem:[%s214] sm:$0xff]
            %217 = vst [vmem:[%s215] sm:$0xff] %v216
            %v218 = vld [vmem:[%s214 + $0x8] sm:$0xff]
            %219 = vst [vmem:[%s215 + $0x8] sm:$0xff] %v218
            %v220 = vld [vmem:[%s214 + $0x10] sm:$0xff]
            %221 = vst [vmem:[%s215 + $0x10] sm:$0xff] %v220
            %v222 = vld [vmem:[%s214 + $0x18] sm:$0xff]
            %223 = vst [vmem:[%s215 + $0x18] sm:$0xff] %v222
            %v224 = vld [vmem:[%s214 + $0x20] sm:$0xff]
            %225 = vst [vmem:[%s215 + $0x20] sm:$0xff] %v224
            %v226 = vld [vmem:[%s214 + $0x28] sm:$0xff]
            %227 = vst [vmem:[%s215 + $0x28] sm:$0xff] %v226
            %v228 = vld [vmem:[%s214 + $0x30] sm:$0xff]
            %229 = vst [vmem:[%s215 + $0x30] sm:$0xff] %v228
            %v230 = vld [vmem:[%s214 + $0x38] sm:$0xff]
            %231 = vst [vmem:[%s215 + $0x38] sm:$0xff] %v230
          $region63: #{reverse.0} parent=57 // loop_footer
            %s213 = sadd.s32 1, %s209
          $region64: #{reverse.0} parent=57 // loop_footer_branch
            %208 = sbr.rel target = $region60
          $region65: #{reverse.0} parent=57 // loop_exit
            _
        $region58: #{reverse.0} parent=42 // pred_fallthru
          _
        // Predicated region
        $region66: #{reverse.0} parent=42 // pred_check
          _
        $region67: #{reverse.0} parent=42 // pred_check_branch
          %233 = sbr.rel target = $region69
        $region68: #{reverse.0} parent=42 // pred_region
          _
        $region69: #{reverse.0} parent=42 // pred_fallthru
          _
      $region43: #{reverse.0} parent=38 // pred_fallthru
        _
      // Predicated region
      $region44: #{reverse.0} parent=38 // pred_check
        _
      $region45: #{reverse.0} parent=38 // pred_check_branch
        %179 = sbr.rel target = $region47
      $region46: #{reverse.0} parent=38 // pred_region
        %s181 = ssub.s32 256, 1
        loop: start=0, step=1, limit=1
        $region48: #{reverse.0} parent=46 // loop_pre_header
          _
        $region49: #{reverse.0} parent=46 // loop_header
          %s183 = sphi 0, %s187
          %p184 = scmp.ge.s32.totalorder %s183, 1
          %s188 = sphi [#allocation1], [#allocation1]
          %s189 = sphi %s1, %s1
        $region50: #{reverse.0} parent=46 // loop_header_branch
          %186 = sbr.rel (%p184) target = $region54
        $region51: #{reverse.0} parent=46 // loop_body
          %v190 = vld [vmem:[%s188] sm:%s181]
          %191 = vst [vmem:[%s189] sm:%s181] %v190
          %v192 = vld [vmem:[%s188 + $0x8] sm:%s181]
          %193 = vst [vmem:[%s189 + $0x8] sm:%s181] %v192
          %v194 = vld [vmem:[%s188 + $0x10] sm:%s181]
          %195 = vst [vmem:[%s189 + $0x10] sm:%s181] %v194
          %v196 = vld [vmem:[%s188 + $0x18] sm:%s181]
          %197 = vst [vmem:[%s189 + $0x18] sm:%s181] %v196
          %v198 = vld [vmem:[%s188 + $0x20] sm:%s181]
          %199 = vst [vmem:[%s189 + $0x20] sm:%s181] %v198
          %v200 = vld [vmem:[%s188 + $0x28] sm:%s181]
          %201 = vst [vmem:[%s189 + $0x28] sm:%s181] %v200
          %v202 = vld [vmem:[%s188 + $0x30] sm:%s181]
          %203 = vst [vmem:[%s189 + $0x30] sm:%s181] %v202
          %v204 = vld [vmem:[%s188 + $0x38] sm:%s181]
          %205 = vst [vmem:[%s189 + $0x38] sm:%s181] %v204
        $region52: #{reverse.0} parent=46 // loop_footer
          %s187 = sadd.s32 1, %s183
        $region53: #{reverse.0} parent=46 // loop_footer_branch
          %182 = sbr.rel target = $region49
        $region54: #{reverse.0} parent=46 // loop_exit
          _
      $region47: #{reverse.0} parent=38 // pred_fallthru
        _
    $region39: #{reverse.0} parent=1 // pred_fallthru
      _
    %234 = vnop

// kernel: a_call__.2
$region0: #{a_call__.2}
  #allocation0 [shape = 'u32[]', space=smem, size = 0x4, offset = 0x4, fixed_abs, tag = 'smem constant byte address 0x4 - core index']
  #allocation1 [shape = 'u32[72,128]{1,0:T(1,128)}', space=vmem, size = 0x9000, scoped, tag = 'internal scratch']
  %s0 = inlined_call_operand.vmem [shape: f32[4,2,32], index: 0, kind: input, shape index: {}]
  %s1 = inlined_call_operand.vmem [shape: f32[4,2,32], index: 1, kind: input, shape index: {}]
  %s2 = inlined_call_operand.vmem [shape: f32[4,4,32], index: 2, kind: input, shape index: {}]
  %s3 = inlined_call_operand.vmem [shape: f32[4,4,32], index: 3, kind: input, shape index: {}]
  %s4 = inlined_call_operand.vmem [shape: f32[2,4,32], index: 4, kind: output, shape index: {0}]
  %s5 = inlined_call_operand.vmem [shape: f32[2,4,32], index: 5, kind: output, shape index: {1}]
  %6 = xla_tuple %s4, %s5
  %s7 = sld [smem:[#allocation0]]
  $region34: #{a_call__.2} parent=0
    _
  %s9 = ssub.s32 1, %s7
  %s10 = scalar_select 0, %s9, %s7
  // Predicated region
  $region2: #{a_call__.2} parent=0 // pred_check
    _
  $region3: #{a_call__.2} parent=0 // pred_check_branch
    %12 = sbr.rel (0) target = $region5
  $region4: #{a_call__.2} parent=0 // pred_region
    _
  $region5: #{a_call__.2} parent=0 // pred_fallthru
    _
  // Predicated region
  $region6: #{a_call__.2} parent=0 // pred_check
    _
  $region7: #{a_call__.2} parent=0 // pred_check_branch
    %14 = sbr.rel (0) target = $region9
  $region8: #{a_call__.2} parent=0 // pred_region
    _
  $region9: #{a_call__.2} parent=0 // pred_fallthru
    _
  // Predicated region
  $region10: #{a_call__.2} parent=0 // pred_check
    _
  $region11: #{a_call__.2} parent=0 // pred_check_branch
    %16 = sbr.rel (0) target = $region13
  $region12: #{a_call__.2} parent=0 // pred_region
    _
  $region13: #{a_call__.2} parent=0 // pred_fallthru
    _
  // Predicated region
  $region14: #{a_call__.2} parent=0 // pred_check
    _
  $region15: #{a_call__.2} parent=0 // pred_check_branch
    %18 = sbr.rel (0) target = $region17
  $region16: #{a_call__.2} parent=0 // pred_region
    _
  $region17: #{a_call__.2} parent=0 // pred_fallthru
    _
  %v19 = vld [vmem:[%s0] sm:$0x3]
  %v21 = vrot.slane %v19, 1
  %v23 = vld [vmem:[%s1] sm:$0x3]
  %v25 = vrot.slane %v23, 1
  %v27 = vld [vmem:[%s2] sm:$0xf]
  %v28 = vld [vmem:[%s3] sm:$0xf]
  %v29 = vadd.f32 %v19, %v23
  %v30 = vadd.f32 %v21, %v25
  %v31 = vsub.f32 %v28, %v27
  %v32 = vadd.f32 %v27, %v28
  %v35 = vperm.slane %v29, 0
  %v36 = vperm.slane %v30, 0
  %v39 = vmul.f32 %v27, %v35
  %v40 = vmul.f32 %v27, %v36
  %v41 = vperm.slane %v19, 0
  %v42 = vperm.slane %v21, 0
  %v45 = vmul.f32 %v41, %v31
  %v46 = vmul.f32 %v42, %v31
  %v47 = vperm.slane %v23, 0
  %v48 = vperm.slane %v25, 0
  %v51 = vmul.f32 %v47, %v32
  %v52 = vmul.f32 %v48, %v32
  %v53 = vsub.f32 %v39, %v51
  %v54 = vsub.f32 %v40, %v52
  %v55 = vadd.f32 %v53, 0.0
  %v56 = vadd.f32 %v54, 0.0
  %v57 = vadd.f32 %v39, %v45
  %v58 = vadd.f32 %v40, %v46
  %v59 = vadd.f32 %v57, 0.0
  %v60 = vadd.f32 %v58, 0.0
  %s61 = scalar_lea.vmem %s0, 2
  %v62 = vld [vmem:[%s61] sm:$0x3]
  %v64 = vrot.slane %v62, 1
  %s66 = scalar_lea.vmem %s1, 2
  %v67 = vld [vmem:[%s66] sm:$0x3]
  %v69 = vrot.slane %v67, 1
  %s71 = scalar_lea.vmem %s2, 4
  %v72 = vld [vmem:[%s71] sm:$0xf]
  %s73 = scalar_lea.vmem %s3, 4
  %v74 = vld [vmem:[%s73] sm:$0xf]
  %v75 = vadd.f32 %v62, %v67
  %v76 = vadd.f32 %v64, %v69
  %v77 = vsub.f32 %v74, %v72
  %v78 = vadd.f32 %v72, %v74
  %v81 = vperm.slane %v75, 0
  %v82 = vperm.slane %v76, 0
  %v85 = vmul.f32 %v72, %v81
  %v86 = vmul.f32 %v72, %v82
  %v87 = vperm.slane %v62, 0
  %v88 = vperm.slane %v64, 0
  %v91 = vmul.f32 %v87, %v77
  %v92 = vmul.f32 %v88, %v77
  %v93 = vperm.slane %v67, 0
  %v94 = vperm.slane %v69, 0
  %v97 = vmul.f32 %v93, %v78
  %v98 = vmul.f32 %v94, %v78
  %v99 = vsub.f32 %v85, %v97
  %v100 = vsub.f32 %v86, %v98
  %v101 = vadd.f32 %v55, %v99
  %v102 = vadd.f32 %v56, %v100
  %v103 = vadd.f32 %v85, %v91
  %v104 = vadd.f32 %v86, %v92
  %v105 = vadd.f32 %v59, %v103
  %v106 = vadd.f32 %v60, %v104
  %s107 = scalar_lea.vmem %s0, 4
  %v108 = vld [vmem:[%s107] sm:$0x3]
  %v110 = vrot.slane %v108, 1
  %s112 = scalar_lea.vmem %s1, 4
  %v113 = vld [vmem:[%s112] sm:$0x3]
  %v115 = vrot.slane %v113, 1
  %s117 = scalar_lea.vmem %s2, 8
  %v118 = vld [vmem:[%s117] sm:$0xf]
  %s119 = scalar_lea.vmem %s3, 8
  %v120 = vld [vmem:[%s119] sm:$0xf]
  %v121 = vadd.f32 %v108, %v113
  %v122 = vadd.f32 %v110, %v115
  %v123 = vsub.f32 %v120, %v118
  %v124 = vadd.f32 %v118, %v120
  %v127 = vperm.slane %v121, 0
  %v128 = vperm.slane %v122, 0
  %v131 = vmul.f32 %v118, %v127
  %v132 = vmul.f32 %v118, %v128
  %v133 = vperm.slane %v108, 0
  %v134 = vperm.slane %v110, 0
  %v137 = vmul.f32 %v133, %v123
  %v138 = vmul.f32 %v134, %v123
  %v139 = vperm.slane %v113, 0
  %v140 = vperm.slane %v115, 0
  %v143 = vmul.f32 %v139, %v124
  %v144 = vmul.f32 %v140, %v124
  %v145 = vsub.f32 %v131, %v143
  %v146 = vsub.f32 %v132, %v144
  %v147 = vadd.f32 %v101, %v145
  %v148 = vadd.f32 %v102, %v146
  %v149 = vadd.f32 %v131, %v137
  %v150 = vadd.f32 %v132, %v138
  %v151 = vadd.f32 %v105, %v149
  %v152 = vadd.f32 %v106, %v150
  %s153 = scalar_lea.vmem %s0, 6
  %v154 = vld [vmem:[%s153] sm:$0x3]
  %v156 = vrot.slane %v154, 1
  %s158 = scalar_lea.vmem %s1, 6
  %v159 = vld [vmem:[%s158] sm:$0x3]
  %v161 = vrot.slane %v159, 1
  %s163 = scalar_lea.vmem %s2, 12
  %v164 = vld [vmem:[%s163] sm:$0xf]
  %s165 = scalar_lea.vmem %s3, 12
  %v166 = vld [vmem:[%s165] sm:$0xf]
  %v167 = vadd.f32 %v154, %v159
  %v168 = vadd.f32 %v156, %v161
  %v169 = vsub.f32 %v166, %v164
  %v170 = vadd.f32 %v164, %v166
  %v173 = vperm.slane %v167, 0
  %v174 = vperm.slane %v168, 0
  %v177 = vmul.f32 %v164, %v173
  %v178 = vmul.f32 %v164, %v174
  %v179 = vperm.slane %v154, 0
  %v180 = vperm.slane %v156, 0
  %v183 = vmul.f32 %v179, %v169
  %v184 = vmul.f32 %v180, %v169
  %v185 = vperm.slane %v159, 0
  %v186 = vperm.slane %v161, 0
  %v189 = vmul.f32 %v185, %v170
  %v190 = vmul.f32 %v186, %v170
  %v191 = vsub.f32 %v177, %v189
  %v192 = vsub.f32 %v178, %v190
  %v193 = vadd.f32 %v147, %v191
  %v194 = vadd.f32 %v148, %v192
  %v195 = vadd.f32 %v177, %v183
  %v196 = vadd.f32 %v178, %v184
  %v197 = vadd.f32 %v151, %v195
  %v198 = vadd.f32 %v152, %v196
  %vm199 = vcmask 257024
  %200 = vst.msk [vmem:[%s4] sm:$0xf] %vm199, %v193
  %201 = vst.msk [vmem:[%s4 + $0x4] sm:$0xf] %vm199, %v194
  %202 = vst.msk [vmem:[%s5] sm:$0xf] %vm199, %v197
  %203 = vst.msk [vmem:[%s5 + $0x4] sm:$0xf] %vm199, %v198
  // Predicated region
  $region18: #{a_call__.2} parent=0 // pred_check
    _
  $region19: #{a_call__.2} parent=0 // pred_check_branch
    %205 = sbr.rel (0) target = $region21
  $region20: #{a_call__.2} parent=0 // pred_region
    _
  $region21: #{a_call__.2} parent=0 // pred_fallthru
    _
  // Predicated region
  $region22: #{a_call__.2} parent=0 // pred_check
    _
  $region23: #{a_call__.2} parent=0 // pred_check_branch
    %207 = sbr.rel (0) target = $region25
  $region24: #{a_call__.2} parent=0 // pred_region
    _
  $region25: #{a_call__.2} parent=0 // pred_fallthru
    _
  // Predicated region
  $region26: #{a_call__.2} parent=0 // pred_check
    _
  $region27: #{a_call__.2} parent=0 // pred_check_branch
    %209 = sbr.rel (0) target = $region29
  $region28: #{a_call__.2} parent=0 // pred_region
    _
  $region29: #{a_call__.2} parent=0 // pred_fallthru
    _
  // Predicated region
  $region30: #{a_call__.2} parent=0 // pred_check
    _
  $region31: #{a_call__.2} parent=0 // pred_check_branch
    %211 = sbr.rel (0) target = $region33
  $region32: #{a_call__.2} parent=0 // pred_region
    _
  $region33: #{a_call__.2} parent=0 // pred_fallthru
    _

// kernel: a_call__.3
$region0: #{a_call__.3}
  #allocation0 [shape = 'u32[]', space=smem, size = 0x4, offset = 0x4, fixed_abs, tag = 'smem constant byte address 0x4 - core index']
  #allocation1 [shape = 'u32[72,128]{1,0:T(1,128)}', space=vmem, size = 0x9000, scoped, tag = 'internal scratch']
  %s0 = inlined_call_operand.vmem [shape: f32[2,4,256], index: 0, kind: input, shape index: {}]
  %s1 = inlined_call_operand.vmem [shape: f32[4,4], index: 1, kind: input, shape index: {}]
  %s2 = inlined_call_operand.vmem [shape: f32[4,1], index: 2, kind: input, shape index: {}]
  %s3 = inlined_call_operand.vmem [shape: f32[2,4,256], index: 3, kind: input, shape index: {}]
  %s4 = inlined_call_operand.vmem [shape: f32[2,4,256], index: 4, kind: output, shape index: {}]
  %s5 = sld [smem:[#allocation0]]
  $region49: #{a_call__.3} parent=0
    _
  %s7 = ssub.s32 1, %s5
  %s8 = scalar_select 0, %s7, %s5
  loop: start=0, step=1, limit=4
  $region2: #{a_call__.3} parent=0 // loop_pre_header
    _
  $region3: #{a_call__.3} parent=0 // loop_header
    %s10 = sphi 0, %s14
    %p11 = scmp.ge.s32.totalorder %s10, 4
    %s17 = sphi 0, %s29
    %s18 = sphi 0, %s25
    %s19 = sphi 0, %s17
    %s20 = sphi 0, %s18
    %s21 = sphi 0, %s19
    %s22 = sphi 0, %s20
    %s34 = sphi 0, %s36
    %s37 = sphi 0, %s34
    %s38 = sphi 0, %s37
    %s54 = sphi 0, %s38
    %s58 = sphi 0, %s58
    %s60 = sphi 0, %s58
    %s61 = sphi 0, %s60
    %s75 = sphi 0, %s61
    %s79 = sphi 0, %s79
    %s81 = sphi 0, %s79
    %s82 = sphi 0, %s81
    %s96 = sphi 0, %s82
    %s104 = sphi 0, %s106
    %s107 = sphi 0, %s104
    %s108 = sphi 0, %s107
    %s124 = sphi 0, %s108
    %s132 = sphi 0, %s134
    %s135 = sphi 0, %s132
    %s136 = sphi 0, %s135
    %s152 = sphi 0, %s136
  $region4: #{a_call__.3} parent=0 // loop_header_branch
    %13 = sbr.rel (%p11) target = $region8
  $region5: #{a_call__.3} parent=0 // loop_body
    %s15 = ssub.s32 %s10, 1
    %s16 = ssub.s32 %s10, 2
    %s23 = sadd.s32 1, %s18
    %p24 = scmp.ge.s32.totalorder %s23, 1
    %s25 = scalar_select %p24, 0, %s23
    %s26 = sadd.s32 1, %s17
    %s27 = scalar_select %p24, %s26, %s17
    %p28 = scmp.ge.s32.totalorder %s27, 2
    %s29 = scalar_select %p28, 0, %s27
    %s30 = ssub.s32 %s17, %s29
    %s31 = ssub.s32 %s18, %s25
    %s32 = sor.u32 %s30, %s31
    %p33 = scmp.eq.s32.totalorder %s32, 0
    %s35 = sadd.s32 %s34, 1
    %s36 = scalar_select %p33, %s34, %s35
    %p39 = pneg %p33
    %p40 = scmp.eq.s32.totalorder %s10, 1
    %p41 = por %p39, %p40
    %p42 = scmp.ne.s32.totalorder %s34, %s37
    %p43 = scmp.eq.s32.totalorder %s10, 0
    %p44 = por %p42, %p43
    %p45 = scmp.ne.s32.totalorder %s34, %s37
    %p46 = scmp.eq.s32.totalorder %s15, 1
    %p47 = por %p45, %p46
    %p48 = scmp.ne.s32.totalorder %s37, %s38
    %p49 = scmp.eq.s32.totalorder %s15, 0
    %p50 = por %p48, %p49
    %p51 = scmp.ne.s32.totalorder %s37, %s38
    %p52 = scmp.eq.s32.totalorder %s16, 1
    %p53 = por %p51, %p52
    %p55 = scmp.ne.s32.totalorder %s38, %s54
    %p56 = scmp.eq.s32.totalorder %s16, 0
    %p57 = por %p55, %p56
    %s59 = sadd.s32 %s58, 1
    %p62 = scmp.eq.s32.totalorder %s10, 1
    %p63 = scmp.ne.s32.totalorder %s58, %s60
    %p64 = scmp.eq.s32.totalorder %s10, 0
    %p65 = por %p63, %p64
    %p66 = scmp.ne.s32.totalorder %s58, %s60
    %p67 = scmp.eq.s32.totalorder %s15, 1
    %p68 = por %p66, %p67
    %p69 = scmp.ne.s32.totalorder %s60, %s61
    %p70 = scmp.eq.s32.totalorder %s15, 0
    %p71 = por %p69, %p70
    %p72 = scmp.ne.s32.totalorder %s60, %s61
    %p73 = scmp.eq.s32.totalorder %s16, 1
    %p74 = por %p72, %p73
    %p76 = scmp.ne.s32.totalorder %s61, %s75
    %p77 = scmp.eq.s32.totalorder %s16, 0
    %p78 = por %p76, %p77
    %s80 = sadd.s32 %s79, 1
    %p83 = scmp.eq.s32.totalorder %s10, 1
    %p84 = scmp.ne.s32.totalorder %s79, %s81
    %p85 = scmp.eq.s32.totalorder %s10, 0
    %p86 = por %p84, %p85
    %p87 = scmp.ne.s32.totalorder %s79, %s81
    %p88 = scmp.eq.s32.totalorder %s15, 1
    %p89 = por %p87, %p88
    %p90 = scmp.ne.s32.totalorder %s81, %s82
    %p91 = scmp.eq.s32.totalorder %s15, 0
    %p92 = por %p90, %p91
    %p93 = scmp.ne.s32.totalorder %s81, %s82
    %p94 = scmp.eq.s32.totalorder %s16, 1
    %p95 = por %p93, %p94
    %p97 = scmp.ne.s32.totalorder %s82, %s96
    %p98 = scmp.eq.s32.totalorder %s16, 0
    %p99 = por %p97, %p98
    %s100 = ssub.s32 %s17, %s29
    %s101 = ssub.s32 %s18, %s25
    %s102 = sor.u32 %s100, %s101
    %p103 = scmp.eq.s32.totalorder %s102, 0
    %s105 = sadd.s32 %s104, 1
    %s106 = scalar_select %p103, %s104, %s105
    %p109 = pneg %p103
    %p110 = scmp.eq.s32.totalorder %s10, 1
    %p111 = por %p109, %p110
    %p112 = scmp.ne.s32.totalorder %s104, %s107
    %p113 = scmp.eq.s32.totalorder %s10, 0
    %p114 = por %p112, %p113
    %p115 = scmp.ne.s32.totalorder %s104, %s107
    %p116 = scmp.eq.s32.totalorder %s15, 1
    %p117 = por %p115, %p116
    %p118 = scmp.ne.s32.totalorder %s107, %s108
    %p119 = scmp.eq.s32.totalorder %s15, 0
    %p120 = por %p118, %p119
    %p121 = scmp.ne.s32.totalorder %s107, %s108
    %p122 = scmp.eq.s32.totalorder %s16, 1
    %p123 = por %p121, %p122
    %p125 = scmp.ne.s32.totalorder %s108, %s124
    %p126 = scmp.eq.s32.totalorder %s16, 0
    %p127 = por %p125, %p126
    %s128 = ssub.s32 %s17, %s29
    %s129 = ssub.s32 %s18, %s25
    %s130 = sor.u32 %s128, %s129
    %p131 = scmp.eq.s32.totalorder %s130, 0
    %s133 = sadd.s32 %s132, 1
    %s134 = scalar_select %p131, %s132, %s133
    %p137 = pneg %p131
    %p138 = scmp.eq.s32.totalorder %s10, 1
    %p139 = por %p137, %p138
    %p140 = scmp.ne.s32.totalorder %s132, %s135
    %p141 = scmp.eq.s32.totalorder %s10, 0
    %p142 = por %p140, %p141
    %p143 = scmp.ne.s32.totalorder %s132, %s135
    %p144 = scmp.eq.s32.totalorder %s15, 1
    %p145 = por %p143, %p144
    %p146 = scmp.ne.s32.totalorder %s135, %s136
    %p147 = scmp.eq.s32.totalorder %s15, 0
    %p148 = por %p146, %p147
    %p149 = scmp.ne.s32.totalorder %s135, %s136
    %p150 = scmp.eq.s32.totalorder %s16, 1
    %p151 = por %p149, %p150
    %p153 = scmp.ne.s32.totalorder %s136, %s152
    %p154 = scmp.eq.s32.totalorder %s16, 0
    %p155 = por %p153, %p154
    %p156 = scmp.le.s32.totalorder 1, %s10
    %p157 = scmp.lt.s32.totalorder %s10, 3
    %p158 = pnand %p156, %p157
    %p159 = pneg %p158
    // Predicated region
    $region9: #{a_call__.3} parent=5 // pred_check
      _
    $region10: #{a_call__.3} parent=5 // pred_check_branch
      %161 = sbr.rel (%p158) target = $region12
    $region11: #{a_call__.3} parent=5 // pred_region
      %s162 = ssub.s32 %s10, 1
      // Predicated region
      $region13: #{a_call__.3} parent=11 // pred_check
        %p163 = pneg %p71
      $region14: #{a_call__.3} parent=11 // pred_check_branch
        %165 = sbr.rel (%p163) target = $region16
      $region15: #{a_call__.3} parent=11 // pred_region
        _
      $region16: #{a_call__.3} parent=11 // pred_fallthru
        _
      // Predicated region
      $region17: #{a_call__.3} parent=11 // pred_check
        %p166 = pneg %p92
      $region18: #{a_call__.3} parent=11 // pred_check_branch
        %168 = sbr.rel (%p166) target = $region20
      $region19: #{a_call__.3} parent=11 // pred_region
        _
      $region20: #{a_call__.3} parent=11 // pred_fallthru
        _
    $region12: #{a_call__.3} parent=5 // pred_fallthru
      _
    %p169 = scmp.lt.s32.totalorder %s10, 2
    // Predicated region
    $region21: #{a_call__.3} parent=5 // pred_check
      %p170 = pneg %p169
    $region22: #{a_call__.3} parent=5 // pred_check_branch
      %172 = sbr.rel (%p170) target = $region24
    $region23: #{a_call__.3} parent=5 // pred_region
      // Predicated region
      $region25: #{a_call__.3} parent=23 // pred_check
        %p173 = pneg %p44
      $region26: #{a_call__.3} parent=23 // pred_check_branch
        %175 = sbr.rel (%p173) target = $region28
      $region27: #{a_call__.3} parent=23 // pred_region
        %s176 = smul.u32 2, %s18
        %p177 = scmp.lt.s32.totalorder %s17, 1
        %s178 = scalar_select %p177, %s17, 1
        %p179 = scmp.lt.s32.totalorder %s176, 1
        %s180 = scalar_select %p179, %s176, 1
        %s181 = smul.addr %s178, 2
        %s182 = sadd.s32 %s180, %s181
        %s183 = smul.addr %s182, 4
        %s184 = scalar_lea.vmem %s0, %s183
        %s185 = smul.u32 2, %s18
      $region28: #{a_call__.3} parent=23 // pred_fallthru
        _
      // Predicated region
      $region29: #{a_call__.3} parent=23 // pred_check
        %p186 = pneg %p114
      $region30: #{a_call__.3} parent=23 // pred_check_branch
        %188 = sbr.rel (%p186) target = $region32
      $region31: #{a_call__.3} parent=23 // pred_region
        %s189 = smul.u32 2, %s18
        %p190 = scmp.lt.s32.totalorder %s17, 1
        %s191 = scalar_select %p190, %s17, 1
        %p192 = scmp.lt.s32.totalorder %s189, 1
        %s193 = scalar_select %p192, %s189, 1
        %s194 = smul.addr %s191, 2
        %s195 = sadd.s32 %s193, %s194
        %s196 = smul.addr %s195, 4
        %s197 = scalar_lea.vmem %s3, %s196
        %s198 = smul.u32 2, %s18
      $region32: #{a_call__.3} parent=23 // pred_fallthru
        _
    $region24: #{a_call__.3} parent=5 // pred_fallthru
      _
    %p199 = scmp.le.s32.totalorder 1, %s10
    %p200 = scmp.lt.s32.totalorder %s10, 3
    %p201 = pnand %p199, %p200
    %p202 = pneg %p201
    // Predicated region
    $region33: #{a_call__.3} parent=5 // pred_check
      _
    $region34: #{a_call__.3} parent=5 // pred_check_branch
      %204 = sbr.rel (%p201) target = $region36
    $region35: #{a_call__.3} parent=5 // pred_region
      %s205 = ssub.s32 %s10, 1
      %s206 = smul.u32 2, %s20
      %p207 = scmp.lt.s32.totalorder %s19, 1
      %s208 = scalar_select %p207, %s19, 1
      %p209 = scmp.lt.s32.totalorder %s206, 1
      %s210 = scalar_select %p209, %s206, 1
      %s211 = smul.addr %s208, 2
      %s212 = sadd.s32 %s210, %s211
      %s213 = smul.addr %s212, 4
      %s214 = scalar_lea.vmem %s0, %s213
      %p215 = pneg %p50
      %p216 = pneg %p47
      %p217 = pneg %p71
      %p218 = pneg %p68
      %p219 = pneg %p92
      %p220 = pneg %p89
      %s221 = smul.u32 2, %s20
      %p222 = scmp.lt.s32.totalorder %s19, 1
      %s223 = scalar_select %p222, %s19, 1
      %p224 = scmp.lt.s32.totalorder %s221, 1
      %s225 = scalar_select %p224, %s221, 1
      %s226 = smul.addr %s223, 2
      %s227 = sadd.s32 %s225, %s226
      %s228 = smul.addr %s227, 4
      %s229 = scalar_lea.vmem %s3, %s228
      %p230 = pneg %p120
      %p231 = pneg %p117
      %p232 = pneg %p148
      %p233 = pneg %p145
      %s234 = smul.u32 2, %s20
      %p235 = scmp.lt.s32.totalorder %s19, 1
      %s236 = scalar_select %p235, %s19, 1
      %p237 = scmp.lt.s32.totalorder %s234, 1
      %s238 = scalar_select %p237, %s234, 1
      %s239 = smul.addr %s236, 2
      %s240 = sadd.s32 %s238, %s239
      %s241 = smul.addr %s240, 4
      %s242 = scalar_lea.vmem %s4, %s241
      %s243 = smul.u32 2, %s20
      %p244 = scmp.lt.s32.totalorder %s19, 1
      %s245 = scalar_select %p244, %s19, 1
      %p246 = scmp.lt.s32.totalorder %s243, 1
      %s247 = scalar_select %p246, %s243, 1
      %s248 = smul.addr %s245, 2
      %s249 = sadd.s32 %s247, %s248
      %s250 = smul.addr %s249, 4
      %s251 = scalar_lea.vmem %s0, %s250
      %s252 = smul.u32 2, %s20
      %s253 = smul.u32 2, %s20
      %p254 = scmp.lt.s32.totalorder %s19, 1
      %s255 = scalar_select %p254, %s19, 1
      %p256 = scmp.lt.s32.totalorder %s253, 1
      %s257 = scalar_select %p256, %s253, 1
      %s258 = smul.addr %s255, 2
      %s259 = sadd.s32 %s257, %s258
      %s260 = smul.addr %s259, 4
      %s261 = scalar_lea.vmem %s3, %s260
      %s262 = smul.u32 2, %s20
      %s263 = smul.u32 2, %s20
      %p264 = scmp.lt.s32.totalorder %s19, 1
      %s265 = scalar_select %p264, %s19, 1
      %p266 = scmp.lt.s32.totalorder %s263, 1
      %s267 = scalar_select %p266, %s263, 1
      %s268 = smul.addr %s265, 2
      %s269 = sadd.s32 %s267, %s268
      %s270 = smul.addr %s269, 4
      %s271 = scalar_lea.vmem %s4, %s270
      %s272 = smul.u32 2, %s20
      %v273 = vld [vmem:[%s251] sm:$0xff]
      %v274 = vld [vmem:[%s1] sm:$0xf]
      %v275 = vld [vmem:[%s261] sm:$0xff]
      %v276 = vld [vmem:[%s2] sm:$0xf]
      %278 = vset.pattern.permute.xlu0 0
      %279 = vperm.xlu0 %278, %v276
      %v280 = vpop.permute.xlu0 %279
      %v282 = vunpack.c.l.s4 839922192
      %v283 = vunpack.c.0.s8 %v282
      %v284 = vperm.slane %v280, %v283
      %v286 = vadd.f32 %v275, %v284
      %288 = vset.pattern.permute.xlu0 0
      %289 = vperm.xlu0 %288, %v274
      %v290 = vpop.permute.xlu0 %289
      %v293 = vperm.slane %v273, 0
      %v294 = vperm.slane %v273, 4
      %v297 = vperm.slane %v293, 0
      %v298 = vperm.slane %v294, 0
      %v299 = vmul.f32 %v290, %v297
      %v300 = vmul.f32 %v290, %v298
      %v303 = vrot.slane %v300, 4
      %vm304 = vcmask 1043456
      %v305 = vsel %vm304, %v299, %v303
      %v307 = vadd.f32 %v286, %v305
      %308 = vset.pattern.permute.xlu0 1
      %309 = vperm.xlu0 %308, %v274
      %v310 = vpop.permute.xlu0 %309
      %v312 = vperm.slane %v273, 1
      %v313 = vperm.slane %v273, 5
      %v316 = vperm.slane %v312, 1
      %v317 = vperm.slane %v313, 1
      %v318 = vmul.f32 %v310, %v316
      %v319 = vmul.f32 %v310, %v317
      %v322 = vrot.slane %v319, 4
      %v323 = vsel %vm304, %v318, %v322
      %v325 = vadd.f32 %v307, %v323
      %326 = vset.pattern.permute.xlu0 2
      %327 = vperm.xlu0 %326, %v274
      %v328 = vpop.permute.xlu0 %327
      %v330 = vperm.slane %v273, 2
      %v331 = vperm.slane %v273, 6
      %v334 = vperm.slane %v330, 2
      %v335 = vperm.slane %v331, 2
      %v336 = vmul.f32 %v328, %v334
      %v337 = vmul.f32 %v328, %v335
      %v340 = vrot.slane %v337, 4
      %v341 = vsel %vm304, %v336, %v340
      %v343 = vadd.f32 %v325, %v341
      %344 = vset.pattern.permute.xlu0 3
      %345 = vperm.xlu0 %344, %v274
      %v346 = vpop.permute.xlu0 %345
      %v348 = vperm.slane %v273, 3
      %v349 = vperm.slane %v273, 7
      %v352 = vperm.slane %v348, 3
      %v353 = vperm.slane %v349, 3
      %v354 = vmul.f32 %v346, %v352
      %v355 = vmul.f32 %v346, %v353
      %v358 = vrot.slane %v355, 4
      %v359 = vsel %vm304, %v354, %v358
      %v361 = vadd.f32 %v343, %v359
      %v362 = vmul.f32 %v361, 0.5
      %v363 = vmul.f32 %v361, 0.70710677
      %v364 = vmul.f32 %v363, %v363
      %v365 = vmin.f32 16.0, %v364
      %v366 = vmul.f32 %v365, 2.1237322e-06
      %v367 = vadd.f32 %v366, 0.00028619796
      %v368 = vmul.f32 %v365, %v367
      %v369 = vadd.f32 %v368, 0.0036580483
      %v370 = vmul.f32 %v365, %v369
      %v371 = vadd.f32 %v370, 0.05243302
      %v372 = vmul.f32 %v365, %v371
      %v373 = vadd.f32 %v372, 0.18741608
      %v374 = vmul.f32 %v365, %v373
      %v375 = vadd.f32 %v374, 1.1283791
      %v376 = vmul.f32 %v363, %v375
      %v377 = vmul.f32 %v365, 3.8918573e-05
      %v378 = vadd.f32 %v377, 0.001143296
      %v379 = vmul.f32 %v365, %v378
      %v380 = vadd.f32 %v379, 0.014752088
      %v381 = vmul.f32 %v365, %v380
      %v382 = vadd.f32 %v381, 0.112945676
      %v383 = vmul.f32 %v365, %v382
      %v384 = vadd.f32 %v383, 0.4994258
      %v385 = vmul.f32 %v365, %v384
      %v386 = vadd.f32 %v385, 1.0
      %v387 = vrcp.pop %v386
      %v388 = vmul.f32 %v386, %v387
      %v389 = vsub.f32 1.0, %v388
      %v390 = vmul.f32 %v387, %v389
      %v391 = vadd.f32 %v387, %v390
      %vm392 = vweird.f32 %v386
      %vm393 = vweird.f32 %v387
      %vm394 = vmor %vm392, %vm393
      %v395 = vsel %vm394, %v387, %v391
      %v396 = vand.u32 2147483647, %v386
      %vm397 = vcmp.eq.f32.partialorder %v396, 8.507059e+37
      %v398 = vand.u32 %v386, 2147483648
      %v399 = vor.u32 1.1754944e-38, %v398
      %v400 = vsel %vm397, %v399, %v395
      %v401 = vmul.f32 %v376, %v400
      %v402 = vmin.f32 %v401, 1.0
      %v403 = vmax.f32 %v402, -1.0
      %v404 = vadd.f32 %v403, 1.0
      %v405 = vmul.f32 %v362, %v404
      %406 = vst [vmem:[%s271] sm:$0xff] %v405
      %s407 = smul.u32 2, %s20
      %p408 = scmp.lt.s32.totalorder %s19, 1
      %s409 = scalar_select %p408, %s19, 1
      %p410 = scmp.lt.s32.totalorder %s407, 1
      %s411 = scalar_select %p410, %s407, 1
      %s412 = smul.addr %s409, 2
      %s413 = sadd.s32 %s411, %s412
      %s414 = smul.addr %s413, 4
      %s415 = scalar_lea.vmem %s4, %s414
      // Predicated region
      $region37: #{a_call__.3} parent=35 // pred_check
        %p416 = pneg %p145
      $region38: #{a_call__.3} parent=35 // pred_check_branch
        %418 = sbr.rel (%p416) target = $region40
      $region39: #{a_call__.3} parent=35 // pred_region
        %s419 = smul.u32 2, %s20
      $region40: #{a_call__.3} parent=35 // pred_fallthru
        _
    $region36: #{a_call__.3} parent=5 // pred_fallthru
      _
    %p420 = scmp.le.s32.totalorder 2, %s10
    // Predicated region
    $region41: #{a_call__.3} parent=5 // pred_check
      %p421 = pneg %p420
    $region42: #{a_call__.3} parent=5 // pred_check_branch
      %423 = sbr.rel (%p421) target = $region44
    $region43: #{a_call__.3} parent=5 // pred_region
      %s424 = ssub.s32 %s10, 2
      // Predicated region
      $region45: #{a_call__.3} parent=43 // pred_check
        %p425 = pneg %p151
      $region46: #{a_call__.3} parent=43 // pred_check_branch
        %427 = sbr.rel (%p425) target = $region48
      $region47: #{a_call__.3} parent=43 // pred_region
        %s428 = smul.u32 2, %s22
        %p429 = scmp.lt.s32.totalorder %s21, 1
        %s430 = scalar_select %p429, %s21, 1
        %p431 = scmp.lt.s32.totalorder %s428, 1
        %s432 = scalar_select %p431, %s428, 1
        %s433 = smul.addr %s430, 2
        %s434 = sadd.s32 %s432, %s433
        %s435 = smul.addr %s434, 4
        %s436 = scalar_lea.vmem %s4, %s435
      $region48: #{a_call__.3} parent=43 // pred_fallthru
        _
    $region44: #{a_call__.3} parent=5 // pred_fallthru
      _
  $region6: #{a_call__.3} parent=0 // loop_footer
    %s14 = sadd.s32 1, %s10
  $region7: #{a_call__.3} parent=0 // loop_footer_branch
    %9 = sbr.rel target = $region3
  $region8: #{a_call__.3} parent=0 // loop_exit
    _

</llo_original>
